<compile_context>
chip_gen: v7x
topology: tpu7x:2x2x1
jax: 0.10.0
libtpu: 0.0.40
codegen_flags: <defaults>
</compile_context>

<pallas_src>
import functools

import jax
import jax.numpy as jnp
import numpy as np
from jax.experimental import pallas as pl
from jax.experimental.pallas import tpu as pltpu

NEG_SLOPE = 0.2
BN_EPS = 1e-5
N_KPOINTS = 15
DIM = 3
LANE = 128


def _leaky(x, slope=NEG_SLOPE):
    return jnp.where(x >= 0, x, slope * x)


def _round_up(x, m):
    return (x + m - 1) // m * m


def _fold_bn(gamma, beta, mean, var, eps=BN_EPS):
    scale = gamma / jnp.sqrt(var + eps)
    shift = beta - mean * scale
    return scale, shift


def _pad2(a, rows, cols):
    return jnp.pad(a, ((0, rows - a.shape[0]), (0, cols - a.shape[1])))


def _pad_rows(a, rows, value=0):
    pad = rows - a.shape[0]
    if pad <= 0:
        return a
    cfg = [(0, pad)] + [(0, 0)] * (a.ndim - 1)
    return jnp.pad(a, cfg, constant_values=value)


# --------------------- kernel 1: unary_1 (Linear + folded BN + LeakyReLU) ---------------------
def _unary1_kernel(feats_ref, w1_ref, aff_ref, h_ref):
    z = jnp.dot(feats_ref[...], w1_ref[...], preferred_element_type=jnp.float32)  # [tn, d2]
    z = z * aff_ref[0:1, :] + aff_ref[1:2, :]                 # folded-BN affine
    h_ref[...] = _leaky(z).astype(h_ref.dtype)                # bf16 store


# --------------------- kernel 2: KPConv + unary_2 + shortcut + residual ---------------------
def _kpconv_kernel(nbr_ref, wts_ref, feats_ref, wkp_ref, w2_ref, ws_ref, aff_ref,
                   out_ref, *, n_kpoints, agg_dtype):
    # Neighbor features stay in bf16 (or are promoted once on v5e); no full f32 slab copy.
    f = nbr_ref[...].astype(agg_dtype)                        # [tn, H, d2]
    w = wts_ref[...].astype(agg_dtype)                        # [tn, H, K]

    # Aggregation: per-kernel-point VPU multiply, f32 reduce over H, immediate bf16 partial.
    parts = []
    for k in range(n_kpoints):                                # small static K -> unrolled
        wk = w[:, :, k:k + 1]                                 # [tn, H, 1]
        pk = jnp.sum((wk * f).astype(jnp.float32), axis=1)    # [tn, d2] f32 accumulation
        parts.append(pk.astype(jnp.bfloat16))
    weighted = jnp.concatenate(parts, axis=-1)                # [tn, K*d2] bf16, lane-dense-ish

    # Single stacked MXU matmul against the pre-flattened kernel weights (contraction K*d2).
    conv = jnp.dot(weighted, wkp_ref[...],
                   preferred_element_type=jnp.float32)        # [tn, d2] f32

    aff = aff_ref[...]                                        # [4, cp] f32
    # unary_2 (Linear + folded BN + LeakyReLU)
    y = jnp.dot(conv.astype(jnp.bfloat16), w2_ref[...],
                preferred_element_type=jnp.float32)           # [tn, cp]
    y = _leaky(y * aff[0:1, :] + aff[1:2, :])
    # shortcut (Linear/Identity + folded BN, no activation) — free MXU slack, no HBM sc buffer
    sc = jnp.dot(feats_ref[...], ws_ref[...],
                 preferred_element_type=jnp.float32)          # [tn, cp]
    sc = sc * aff[2:3, :] + aff[3:4, :]
    out_ref[...] = (y + sc).astype(out_ref.dtype)             # lane-dense bf16 store


def kpconv_resblock_forward(feats, xyz, batch, neighbor_idx, params, *,
                            tile_n=128, agg_dtype=jnp.bfloat16, out_dtype=jnp.bfloat16):
    """Mirror of KPConvResBlock.forward (batch arg unused, as in torch).

    tile_n: point-tile size; sweep 128/256/512 (keep N/tile_n >= 2 on v7x so both TCs work).
    agg_dtype: dtype for the per-kernel-point VPU multiply; bf16 on v6e/v7x,
               pass jnp.float32 on v5e (no native bf16 VALU).
    """
    del batch
    N, cin = feats.shape
    H = neighbor_idx.shape[1]
    kpoints = params["kpoints"]                               # [K, 3]
    K = kpoints.shape[0]
    d2 = params["w1"].shape[1]
    cout = params["w2"].shape[1]
    cp = _round_up(cout, LANE)                                # only the OUTPUT is lane-padded
    bf16 = jnp.bfloat16

    assert tile_n % 8 == 0
    tn = tile_n
    n_pad = max(_round_up(N, tn), tn)                         # pad points to a tile multiple
    nt = n_pad // tn

    # ---- fold BN (eval mode) ----
    s1, b1 = _fold_bn(params["bn1_g"], params["bn1_b"], params["bn1_m"], params["bn1_v"])
    s2, b2 = _fold_bn(params["bn2_g"], params["bn2_b"], params["bn2_m"], params["bn2_v"])
    ss, bs = _fold_bn(params["bns_g"], params["bns_b"], params["bns_m"], params["bns_v"])

    w1b = params["w1"].astype(bf16)                            # [cin, d2]
    aff1 = jnp.stack([s1, b1]).astype(jnp.float32)             # [2, d2]
    wkp_flat = params["wkp"].reshape(K * d2, d2).astype(bf16)  # [K*d2, d2] real contraction
    w2p = _pad2(params["w2"], d2, cp).astype(bf16)             # [d2, cp]
    wsp = _pad2(params["ws"], cin, cp).astype(bf16)            # [cin, cp]
    aff2s = jnp.stack([jnp.pad(s2, (0, cp - cout)), jnp.pad(b2, (0, cp - cout)),
                       jnp.pad(ss, (0, cp - cout)), jnp.pad(bs, (0, cp - cout))]
                      ).astype(jnp.float32)                    # [4, cp]

    feats_p = _pad_rows(feats, n_pad).astype(bf16)             # [n_pad, cin]
    nbr_p = _pad_rows(neighbor_idx, n_pad, value=N).astype(jnp.int32)  # padded rows -> shadow
    xyz_p = _pad_rows(xyz, n_pad)

    # NOTE: weight operands with constant index_maps could take pipeline_mode=pl.Buffered(1)
    # for extra VMEM headroom on v7x's 64 MiB; they are KB-scale here so it is left off.
    cparams = pltpu.CompilerParams(dimension_semantics=("parallel",),
                                   vmem_limit_bytes=32 * 1024 * 1024)

    # ---- call 1: unary_1 over all (padded) points, tiled over point tiles ----
    h = pl.pallas_call(
        _unary1_kernel,
        grid=(nt,),
        in_specs=[
            pl.BlockSpec((tn, cin), lambda i: (i, 0)),
            pl.BlockSpec((cin, d2), lambda i: (0, 0)),
            pl.BlockSpec((2, d2), lambda i: (0, 0)),
        ],
        out_specs=pl.BlockSpec((tn, d2), lambda i: (i, 0)),
        out_shape=jax.ShapeDtypeStruct((n_pad, d2), bf16),
        compiler_params=cparams,
    )(feats_p, w1b, aff1)

    # ---- glue (plain XLA): neighbor gathers + KP influence weights, at REAL channel width ----
    # TODO(synk): the [N, H, d2] gathered slab is still an XLA-materialized HBM round trip;
    # an in-kernel gather (jnp.take on a VMEM-resident h, VMEM-gated per generation, or a
    # scalar-prefetch DMA gather) would remove it but row-gather lowering support is not
    # guaranteed across Mosaic versions, so it stays in the glue for now.
    h_gather = jnp.concatenate([h[:N], jnp.zeros((1, d2), bf16)], axis=0)  # shadow row = 0
    nbr_feat = h_gather[nbr_p]                                 # [n_pad, H, d2] bf16

    support = jnp.concatenate([xyz, jnp.full((1, DIM), 1e6, xyz.dtype)], axis=0)  # [N+1, 3]
    centered = support[nbr_p] - xyz_p[:, None, :]              # [n_pad, H, 3]
    diff = centered[:, :, None, :] - kpoints[None, None, :, :]  # [n_pad, H, K, 3]
    sq = jnp.sum(diff * diff, axis=-1)                          # f32; shadow ~3e12 is safe
    wts = jnp.maximum(1.0 - jnp.sqrt(sq) / params["kp_extent"], 0.0).astype(bf16)  # [n_pad,H,K]

    # ---- call 2: KPConv + unary_2 + shortcut + residual, tiled over point tiles ----
    out = pl.pallas_call(
        functools.partial(_kpconv_kernel, n_kpoints=K, agg_dtype=agg_dtype),
        grid=(nt,),
        in_specs=[
            pl.BlockSpec((tn, H, d2), lambda i: (i, 0, 0)),     # gathered neighbor feats (bf16)
            pl.BlockSpec((tn, H, K), lambda i: (i, 0, 0)),      # KP influence weights (bf16)
            pl.BlockSpec((tn, cin), lambda i: (i, 0)),          # feats tile (for shortcut)
            pl.BlockSpec((K * d2, d2), lambda i: (0, 0)),       # stacked KP weights
            pl.BlockSpec((d2, cp), lambda i: (0, 0)),           # unary_2 weight
            pl.BlockSpec((cin, cp), lambda i: (0, 0)),          # shortcut weight
            pl.BlockSpec((4, cp), lambda i: (0, 0)),            # folded BN affines (u2, sc)
        ],
        out_specs=pl.BlockSpec((tn, cp), lambda i: (i, 0)),
        out_shape=jax.ShapeDtypeStruct((n_pad, cp), bf16),
        compiler_params=cparams,
    )(nbr_feat, wts, feats_p, wkp_flat, w2p, wsp, aff2s)

    return out[:N, :cout].astype(out_dtype)


def _reference_forward(feats, xyz, neighbor_idx, params, agg_dtype=jnp.bfloat16):
    """Plain-JAX mirror of the torch forward (same bf16 cast points as the kernels)."""
    bf16, f32 = jnp.bfloat16, jnp.float32
    kpoints = params["kpoints"]
    d2 = params["w1"].shape[1]

    def mm(a, b):
        return jnp.dot(a.astype(bf16), b.astype(bf16), preferred_element_type=f32)

    s1, b1 = _fold_bn(params["bn1_g"], params["bn1_b"], params["bn1_m"], params["bn1_v"])
    s2, b2 = _fold_bn(params["bn2_g"], params["bn2_b"], params["bn2_m"], params["bn2_v"])
    ss, bs = _fold_bn(params["bns_g"], params["bns_b"], params["bns_m"], params["bns_v"])

    h = _leaky(mm(feats, params["w1"]) * s1 + b1).astype(bf16)  # unary_1 (h stored bf16)

    support = jnp.concatenate([xyz, jnp.full((1, DIM), 1e6, xyz.dtype)], axis=0)
    nbrs = support[neighbor_idx]                               # [N, H, 3]
    diff = (nbrs - xyz[:, None, :])[:, :, None, :] - kpoints[None, None, :, :]
    sq = jnp.sum(diff ** 2, axis=3)                            # [N, H, K] f32
    w = jnp.maximum(1.0 - jnp.sqrt(sq) / params["kp_extent"], 0.0).astype(bf16)

    fpad = jnp.concatenate([h, jnp.zeros((1, d2), bf16)], axis=0)
    nf = fpad[neighbor_idx]                                    # [N, H, d2] bf16
    prod = (w.astype(agg_dtype)[:, :, :, None] * nf.astype(agg_dtype)[:, :, None, :])
    weighted = jnp.sum(prod.astype(f32), axis=1).astype(bf16)  # [N, K, d2]
    conv = jnp.einsum('nkc,kcd->nd', weighted, params["wkp"].astype(bf16),
                      preferred_element_type=f32)

    y = _leaky(mm(conv, params["w2"]) * s2 + b2)               # unary_2
    sc = mm(feats, params["ws"]) * ss + bs                     # shortcut
    return y + sc


def make_params(key, in_channels, out_channels, prev_grid_size, sigma=1.0):
    d2 = out_channels // 4
    point_influence = prev_grid_size * sigma
    kernel_radius = 1.5 * point_influence
    ks = jax.random.split(key, 18)

    # TODO(synk): torch loads optimized kernel point dispositions (load_kernels);
    # here we use deterministic random points inside the kernel-radius ball.
    kpoints = jax.random.normal(ks[0], (N_KPOINTS, DIM), jnp.float32) * (kernel_radius / 2.0)

    def lin(k, fin, fout):
        return jax.random.normal(k, (fin, fout), jnp.float32) * (1.0 / np.sqrt(fin))

    params = {
        "kp_extent": point_influence,
        "kpoints": kpoints,
        "w1": lin(ks[1], in_channels, d2),
        "wkp": jax.random.normal(ks[2], (N_KPOINTS, d2, d2), jnp.float32)
               * np.sqrt(2.0 / (d2 + d2)),
        "w2": lin(ks[3], d2, out_channels),
        "ws": (lin(ks[4], in_channels, out_channels)
               if in_channels != out_channels
               else jnp.eye(in_channels, dtype=jnp.float32)),
        # BatchNorm (eval mode) params / running stats, deterministic non-trivial
        "bn1_g": 1.0 + 0.1 * jax.random.normal(ks[5], (d2,), jnp.float32),
        "bn1_b": 0.1 * jax.random.normal(ks[6], (d2,), jnp.float32),
        "bn1_m": 0.05 * jax.random.normal(ks[7], (d2,), jnp.float32),
        "bn1_v": jnp.abs(1.0 + 0.1 * jax.random.normal(ks[8], (d2,), jnp.float32)),
        "bn2_g": 1.0 + 0.1 * jax.random.normal(ks[9], (out_channels,), jnp.float32),
        "bn2_b": 0.1 * jax.random.normal(ks[10], (out_channels,), jnp.float32),
        "bn2_m": 0.05 * jax.random.normal(ks[11], (out_channels,), jnp.float32),
        "bn2_v": jnp.abs(1.0 + 0.1 * jax.random.normal(ks[12], (out_channels,), jnp.float32)),
        "bns_g": 1.0 + 0.1 * jax.random.normal(ks[13], (out_channels,), jnp.float32),
        "bns_b": 0.1 * jax.random.normal(ks[14], (out_channels,), jnp.float32),
        "bns_m": 0.05 * jax.random.normal(ks[15], (out_channels,), jnp.float32),
        "bns_v": jnp.abs(1.0 + 0.1 * jax.random.normal(ks[16], (out_channels,), jnp.float32)),
    }
    if in_channels == out_channels:  # Identity shortcut: fold to exact identity
        params["bns_g"] = jnp.ones((out_channels,), jnp.float32)
        params["bns_b"] = jnp.zeros((out_channels,), jnp.float32)
        params["bns_m"] = jnp.zeros((out_channels,), jnp.float32)
        params["bns_v"] = jnp.ones((out_channels,), jnp.float32) - BN_EPS
    return params


if __name__ == "__main__":
    key = jax.random.PRNGKey(0)
    N, H = 256, 8                    # points, neighbors per point (nt = 2 at tile_n = 128)
    in_channels, out_channels = 16, 32
    prev_grid_size = 0.04

    k_feat, k_xyz, k_nbr, k_par = jax.random.split(key, 4)
    feats = jax.random.normal(k_feat, (N, in_channels), jnp.float32)
    xyz = jax.random.uniform(k_xyz, (N, DIM), jnp.float32) * 0.1
    # index == N means shadow neighbor (exercises the shadow path)
    neighbor_idx = jax.random.randint(k_nbr, (N, H), 0, N + 1, jnp.int32)
    batch = jnp.zeros((N,), jnp.int32)  # unused by forward (kept for signature parity)

    params = make_params(k_par, in_channels, out_channels, prev_grid_size)

    out = kpconv_resblock_forward(feats, xyz, batch, neighbor_idx, params,
                                  tile_n=128, agg_dtype=jnp.bfloat16)
    out = jax.block_until_ready(out)

    ref = _reference_forward(feats, xyz, neighbor_idx, params)
    np.testing.assert_allclose(np.asarray(out, dtype=np.float32), np.asarray(ref),
                               rtol=3e-2, atol=3e-2)

    print("KERNEL_OK")
</pallas_src>

<mosaic_0001>
module attributes {stable_mosaic.version = 11 : i64} {
  func.func @_unary1_kernel(%arg0: i32, %arg1: memref<128x16xbf16, #tpu.memory_space<vmem>>, %arg2: memref<16x8xbf16, #tpu.memory_space<vmem>>, %arg3: memref<2x8xf32, #tpu.memory_space<vmem>>, %arg4: memref<128x8xbf16, #tpu.memory_space<vmem>>) attributes {dimension_semantics = [#tpu.dimension_semantics<parallel>], iteration_bounds = array<i64: 2>, scalar_prefetch = 0 : i64, scratch_operands = 0 : i64, tpu.core_type = #tpu.core_type<tc>, window_params = [{transform_indices = @transform_0, window_bounds = array<i64: 128, 16>}, {pipeline_mode = #tpu.pipeline_mode<synchronous>, transform_indices = @transform_1, window_bounds = array<i64: 16, 8>}, {pipeline_mode = #tpu.pipeline_mode<synchronous>, transform_indices = @transform_2, window_bounds = array<i64: 2, 8>}, {transform_indices = @transform_3, window_bounds = array<i64: 128, 8>}]} {
    %c0 = arith.constant 0 : index
    %c0_0 = arith.constant 0 : index
    %0 = vector.load %arg1[%c0, %c0_0] : memref<128x16xbf16, #tpu.memory_space<vmem>>, vector<128x16xbf16>
    %c0_1 = arith.constant 0 : index
    %c0_2 = arith.constant 0 : index
    %1 = vector.load %arg2[%c0_1, %c0_2] : memref<16x8xbf16, #tpu.memory_space<vmem>>, vector<16x8xbf16>
    %cst = arith.constant dense<0.000000e+00> : vector<128x8xf32>
    %2 = tpu.matmul %0, %1, %cst {dimension_numbers = #tpu.dot_dimension_numbers<[1], [0], [0], [1], [0, 0, 1, 1], [], []>} : vector<128x16xbf16>, vector<16x8xbf16>, vector<128x8xf32> -> vector<128x8xf32>
    %c0_3 = arith.constant 0 : index
    %c0_4 = arith.constant 0 : index
    %3 = vector.load %arg3[%c0_3, %c0_4] : memref<2x8xf32, #tpu.memory_space<vmem>>, vector<1x8xf32>
    %4 = vector.broadcast %3 : vector<1x8xf32> to vector<128x8xf32>
    %5 = arith.mulf %2, %4 : vector<128x8xf32>
    %c1 = arith.constant 1 : index
    %c0_5 = arith.constant 0 : index
    %6 = vector.load %arg3[%c1, %c0_5] : memref<2x8xf32, #tpu.memory_space<vmem>>, vector<1x8xf32>
    %7 = vector.broadcast %6 : vector<1x8xf32> to vector<128x8xf32>
    %8 = arith.addf %5, %7 : vector<128x8xf32>
    %cst_6 = arith.constant 0.000000e+00 : f32
    %9 = vector.broadcast %cst_6 : f32 to vector<128x8xf32>
    %10 = arith.cmpf oge, %8, %9 : vector<128x8xf32>
    %cst_7 = arith.constant 2.000000e-01 : f32
    %11 = vector.broadcast %cst_7 : f32 to vector<128x8xf32>
    %12 = arith.mulf %11, %8 : vector<128x8xf32>
    %13 = arith.select %10, %8, %12 : vector<128x8xi1>, vector<128x8xf32>
    %14 = arith.truncf %13 : vector<128x8xf32> to vector<128x8xbf16>
    %c0_8 = arith.constant 0 : index
    %c0_9 = arith.constant 0 : index
    %15 = vector.load %arg4[%c0_8, %c0_9] : memref<128x8xbf16, #tpu.memory_space<vmem>>, vector<128x8xbf16>
    tpu.vector_store %arg4[%c0_8, %c0_9], %14 {strides = array<i32>} : memref<128x8xbf16, #tpu.memory_space<vmem>>, vector<128x8xbf16>,
    return
  }
  func.func @transform_0(%arg0: i32) -> (i32, i32) {
    %c0_i32 = arith.constant 0 : i32
    %c0_i32_0 = arith.constant 0 : i32
    return %arg0, %c0_i32 : i32, i32
  }
  func.func @transform_1(%arg0: i32) -> (i32, i32) {
    %c0_i32 = arith.constant 0 : i32
    %c0_i32_0 = arith.constant 0 : i32
    %c0_i32_1 = arith.constant 0 : i32
    return %c0_i32, %c0_i32_0 : i32, i32
  }
  func.func @transform_2(%arg0: i32) -> (i32, i32) {
    %c0_i32 = arith.constant 0 : i32
    %c0_i32_0 = arith.constant 0 : i32
    %c0_i32_1 = arith.constant 0 : i32
    return %c0_i32, %c0_i32_0 : i32, i32
  }
  func.func @transform_3(%arg0: i32) -> (i32, i32) {
    %c0_i32 = arith.constant 0 : i32
    %c0_i32_0 = arith.constant 0 : i32
    return %arg0, %c0_i32 : i32, i32
  }
}

</mosaic_0001>

<llo_original>
// kernel: tpu_custom_call.1
$region0: #{tpu_custom_call.1}
  #allocation0 [shape = 'u32[]', space=smem, size = 0x4, offset = 0x4, fixed_abs, tag = 'smem constant byte address 0x4 - core index']
  #allocation1 [shape = 'u32[144,128]{1,0:T(1,128)}', space=vmem, size = 0x12000, scoped, tag = 'internal scratch']
  %s0 = inlined_call_operand.vmem [shape: bf16[256,16], index: 0, kind: input, shape index: {}]
  %s1 = inlined_call_operand.vmem [shape: bf16[16,8], index: 1, kind: input, shape index: {}]
  %s2 = inlined_call_operand.vmem [shape: f32[2,8], index: 2, kind: input, shape index: {}]
  %s3 = inlined_call_operand.vmem [shape: bf16[256,8], index: 3, kind: output, shape index: {}]
  %s4 = sld [smem:[#allocation0]]
  $region45: #{tpu_custom_call.1} parent=0
    _
  %s6 = ssub.s32 1, %s4
  %s7 = scalar_select 0, %s6, %s4
  loop: start=0, step=1, limit=4
  $region2: #{tpu_custom_call.1} parent=0 // loop_pre_header
    _
  $region3: #{tpu_custom_call.1} parent=0 // loop_header
    %s9 = sphi 0, %s13
    %p10 = scmp.ge.s32.totalorder %s9, 4
    %s19 = sphi 0, %s21
    %s22 = sphi 0, %s19
    %s23 = sphi 0, %s22
    %s39 = sphi 0, %s23
    %s43 = sphi 0, %s43
    %s45 = sphi 0, %s43
    %s46 = sphi 0, %s45
    %s60 = sphi 0, %s46
    %s64 = sphi 0, %s64
    %s66 = sphi 0, %s64
    %s67 = sphi 0, %s66
    %s81 = sphi 0, %s67
    %s87 = sphi 0, %s89
    %s90 = sphi 0, %s87
    %s91 = sphi 0, %s90
    %s107 = sphi 0, %s91
  $region4: #{tpu_custom_call.1} parent=0 // loop_header_branch
    %12 = sbr.rel (%p10) target = $region8
  $region5: #{tpu_custom_call.1} parent=0 // loop_body
    %s14 = ssub.s32 %s9, 1
    %s15 = ssub.s32 %s9, 2
    %s16 = sadd.s32 %s9, 1
    %s17 = ssub.s32 %s9, %s16
    %p18 = scmp.eq.s32.totalorder %s17, 0
    %s20 = sadd.s32 %s19, 1
    %s21 = scalar_select %p18, %s19, %s20
    %p24 = pneg %p18
    %p25 = scmp.eq.s32.totalorder %s9, 1
    %p26 = por %p24, %p25
    %p27 = scmp.ne.s32.totalorder %s19, %s22
    %p28 = scmp.eq.s32.totalorder %s9, 0
    %p29 = por %p27, %p28
    %p30 = scmp.ne.s32.totalorder %s19, %s22
    %p31 = scmp.eq.s32.totalorder %s14, 1
    %p32 = por %p30, %p31
    %p33 = scmp.ne.s32.totalorder %s22, %s23
    %p34 = scmp.eq.s32.totalorder %s14, 0
    %p35 = por %p33, %p34
    %p36 = scmp.ne.s32.totalorder %s22, %s23
    %p37 = scmp.eq.s32.totalorder %s15, 1
    %p38 = por %p36, %p37
    %p40 = scmp.ne.s32.totalorder %s23, %s39
    %p41 = scmp.eq.s32.totalorder %s15, 0
    %p42 = por %p40, %p41
    %s44 = sadd.s32 %s43, 1
    %p47 = scmp.eq.s32.totalorder %s9, 1
    %p48 = scmp.ne.s32.totalorder %s43, %s45
    %p49 = scmp.eq.s32.totalorder %s9, 0
    %p50 = por %p48, %p49
    %p51 = scmp.ne.s32.totalorder %s43, %s45
    %p52 = scmp.eq.s32.totalorder %s14, 1
    %p53 = por %p51, %p52
    %p54 = scmp.ne.s32.totalorder %s45, %s46
    %p55 = scmp.eq.s32.totalorder %s14, 0
    %p56 = por %p54, %p55
    %p57 = scmp.ne.s32.totalorder %s45, %s46
    %p58 = scmp.eq.s32.totalorder %s15, 1
    %p59 = por %p57, %p58
    %p61 = scmp.ne.s32.totalorder %s46, %s60
    %p62 = scmp.eq.s32.totalorder %s15, 0
    %p63 = por %p61, %p62
    %s65 = sadd.s32 %s64, 1
    %p68 = scmp.eq.s32.totalorder %s9, 1
    %p69 = scmp.ne.s32.totalorder %s64, %s66
    %p70 = scmp.eq.s32.totalorder %s9, 0
    %p71 = por %p69, %p70
    %p72 = scmp.ne.s32.totalorder %s64, %s66
    %p73 = scmp.eq.s32.totalorder %s14, 1
    %p74 = por %p72, %p73
    %p75 = scmp.ne.s32.totalorder %s66, %s67
    %p76 = scmp.eq.s32.totalorder %s14, 0
    %p77 = por %p75, %p76
    %p78 = scmp.ne.s32.totalorder %s66, %s67
    %p79 = scmp.eq.s32.totalorder %s15, 1
    %p80 = por %p78, %p79
    %p82 = scmp.ne.s32.totalorder %s67, %s81
    %p83 = scmp.eq.s32.totalorder %s15, 0
    %p84 = por %p82, %p83
    %s85 = ssub.s32 %s9, %s16
    %p86 = scmp.eq.s32.totalorder %s85, 0
    %s88 = sadd.s32 %s87, 1
    %s89 = scalar_select %p86, %s87, %s88
    %p92 = pneg %p86
    %p93 = scmp.eq.s32.totalorder %s9, 1
    %p94 = por %p92, %p93
    %p95 = scmp.ne.s32.totalorder %s87, %s90
    %p96 = scmp.eq.s32.totalorder %s9, 0
    %p97 = por %p95, %p96
    %p98 = scmp.ne.s32.totalorder %s87, %s90
    %p99 = scmp.eq.s32.totalorder %s14, 1
    %p100 = por %p98, %p99
    %p101 = scmp.ne.s32.totalorder %s90, %s91
    %p102 = scmp.eq.s32.totalorder %s14, 0
    %p103 = por %p101, %p102
    %p104 = scmp.ne.s32.totalorder %s90, %s91
    %p105 = scmp.eq.s32.totalorder %s15, 1
    %p106 = por %p104, %p105
    %p108 = scmp.ne.s32.totalorder %s91, %s107
    %p109 = scmp.eq.s32.totalorder %s15, 0
    %p110 = por %p108, %p109
    %p111 = scmp.le.s32.totalorder 1, %s9
    %p112 = scmp.lt.s32.totalorder %s9, 3
    %p113 = pnand %p111, %p112
    %p114 = pneg %p113
    // Predicated region
    $region9: #{tpu_custom_call.1} parent=5 // pred_check
      _
    $region10: #{tpu_custom_call.1} parent=5 // pred_check_branch
      %116 = sbr.rel (%p113) target = $region12
    $region11: #{tpu_custom_call.1} parent=5 // pred_region
      %s117 = ssub.s32 %s9, 1
      // Predicated region
      $region13: #{tpu_custom_call.1} parent=11 // pred_check
        %p118 = pneg %p56
      $region14: #{tpu_custom_call.1} parent=11 // pred_check_branch
        %120 = sbr.rel (%p118) target = $region16
      $region15: #{tpu_custom_call.1} parent=11 // pred_region
        _
      $region16: #{tpu_custom_call.1} parent=11 // pred_fallthru
        _
      // Predicated region
      $region17: #{tpu_custom_call.1} parent=11 // pred_check
        %p121 = pneg %p77
      $region18: #{tpu_custom_call.1} parent=11 // pred_check_branch
        %123 = sbr.rel (%p121) target = $region20
      $region19: #{tpu_custom_call.1} parent=11 // pred_region
        _
      $region20: #{tpu_custom_call.1} parent=11 // pred_fallthru
        _
    $region12: #{tpu_custom_call.1} parent=5 // pred_fallthru
      _
    %p124 = scmp.lt.s32.totalorder %s9, 2
    // Predicated region
    $region21: #{tpu_custom_call.1} parent=5 // pred_check
      %p125 = pneg %p124
    $region22: #{tpu_custom_call.1} parent=5 // pred_check_branch
      %127 = sbr.rel (%p125) target = $region24
    $region23: #{tpu_custom_call.1} parent=5 // pred_region
      // Predicated region
      $region25: #{tpu_custom_call.1} parent=23 // pred_check
        %p128 = pneg %p29
      $region26: #{tpu_custom_call.1} parent=23 // pred_check_branch
        %130 = sbr.rel (%p128) target = $region28
      $region27: #{tpu_custom_call.1} parent=23 // pred_region
        %s131 = smul.u32 16, %s9
        %p132 = scmp.lt.s32.totalorder %s131, 31
        %s133 = scalar_select %p132, %s131, 31
        %s134 = smul.addr %s133, 4
        %s135 = scalar_lea.vmem %s0, %s134
        %s136 = smul.u32 16, %s9
      $region28: #{tpu_custom_call.1} parent=23 // pred_fallthru
        _
    $region24: #{tpu_custom_call.1} parent=5 // pred_fallthru
      _
    %p137 = scmp.le.s32.totalorder 1, %s9
    %p138 = scmp.lt.s32.totalorder %s9, 3
    %p139 = pnand %p137, %p138
    %p140 = pneg %p139
    // Predicated region
    $region29: #{tpu_custom_call.1} parent=5 // pred_check
      _
    $region30: #{tpu_custom_call.1} parent=5 // pred_check_branch
      %142 = sbr.rel (%p139) target = $region32
    $region31: #{tpu_custom_call.1} parent=5 // pred_region
      %s143 = ssub.s32 %s9, 1
      %s144 = smul.u32 16, %s14
      %p145 = scmp.lt.s32.totalorder %s144, 31
      %s146 = scalar_select %p145, %s144, 31
      %s147 = smul.addr %s146, 4
      %s148 = scalar_lea.vmem %s0, %s147
      %p149 = pneg %p35
      %p150 = pneg %p32
      %p151 = pneg %p56
      %p152 = pneg %p53
      %p153 = pneg %p77
      %p154 = pneg %p74
      %p155 = pneg %p103
      %p156 = pneg %p100
      %s157 = smul.u32 16, %s14
      %p158 = scmp.lt.s32.totalorder %s157, 31
      %s159 = scalar_select %p158, %s157, 31
      %s160 = smul.addr %s159, 4
      %s161 = scalar_lea.vmem %s3, %s160
      %s162 = smul.u32 16, %s14
      %p163 = scmp.lt.s32.totalorder %s162, 31
      %s164 = scalar_select %p163, %s162, 31
      %s165 = smul.addr %s164, 4
      %s166 = scalar_lea.vmem %s0, %s165
      %s167 = smul.u32 16, %s14
      %s168 = smul.u32 16, %s14
      %p169 = scmp.lt.s32.totalorder %s168, 31
      %s170 = scalar_select %p169, %s168, 31
      %s171 = smul.addr %s170, 4
      %s172 = scalar_lea.vmem %s3, %s171
      %s173 = smul.u32 16, %s14
      %v175 = vld [vmem:[%s166] sm:$0xf]
      %v176 = vld [vmem:[%s166 + $0x4] sm:$0xf]
      %v177 = vld [vmem:[%s166 + $0x8] sm:$0xf]
      %v178 = vld [vmem:[%s166 + $0xc] sm:$0xf]
      %v179 = vld [vmem:[%s166 + $0x10] sm:$0xf]
      %v180 = vld [vmem:[%s166 + $0x14] sm:$0xf]
      %v181 = vld [vmem:[%s166 + $0x18] sm:$0xf]
      %v182 = vld [vmem:[%s166 + $0x1c] sm:$0xf]
      %v183 = vld [vmem:[%s166 + $0x20] sm:$0xf]
      %v184 = vld [vmem:[%s166 + $0x24] sm:$0xf]
      %v185 = vld [vmem:[%s166 + $0x28] sm:$0xf]
      %v186 = vld [vmem:[%s166 + $0x2c] sm:$0xf]
      %v187 = vld [vmem:[%s166 + $0x30] sm:$0xf]
      %v188 = vld [vmem:[%s166 + $0x34] sm:$0xf]
      %v189 = vld [vmem:[%s166 + $0x38] sm:$0xf]
      %v190 = vld [vmem:[%s166 + $0x3c] sm:$0xf]
      %v191 = vld [vmem:[%s1] sm:$0xf]
      %v192 = vld [vmem:[%s1 + $0x4] sm:$0xf]
      %v209 = vunpack.c.l.b16 %v175
      %v210 = vunpack.c.l.b16 %v176
      %v211 = vunpack.c.l.b16 %v177
      %v212 = vunpack.c.l.b16 %v178
      %v213 = vunpack.c.l.b16 %v179
      %v214 = vunpack.c.l.b16 %v180
      %v215 = vunpack.c.l.b16 %v181
      %v216 = vunpack.c.l.b16 %v182
      %v217 = vunpack.c.l.b16 %v183
      %v218 = vunpack.c.l.b16 %v184
      %v219 = vunpack.c.l.b16 %v185
      %v220 = vunpack.c.l.b16 %v186
      %v221 = vunpack.c.l.b16 %v187
      %v222 = vunpack.c.l.b16 %v188
      %v223 = vunpack.c.l.b16 %v189
      %v224 = vunpack.c.l.b16 %v190
      %v225 = vpack.c.b16 %v210, %v209
      %v226 = vpack.c.b16 %v212, %v211
      %v227 = vpack.c.b16 %v214, %v213
      %v228 = vpack.c.b16 %v216, %v215
      %v229 = vpack.c.b16 %v218, %v217
      %v230 = vpack.c.b16 %v220, %v219
      %v231 = vpack.c.b16 %v222, %v221
      %v232 = vpack.c.b16 %v224, %v223
      %v235 = vunpack.c.l.b16 %v191
      %v236 = vunpack.c.l.b16 %v192
      %v237 = vpack.c.b16 %v236, %v235
      %vm239 = vcmask 130048
      %v241 = vsel %vm239, %v225, 0
      %v244 = vsel %vm239, %v226, 0
      %v247 = vsel %vm239, %v227, 0
      %v250 = vsel %vm239, %v228, 0
      %v253 = vsel %vm239, %v229, 0
      %v256 = vsel %vm239, %v230, 0
      %v259 = vsel %vm239, %v231, 0
      %v262 = vsel %vm239, %v232, 0
      %264 = vmatprep.subr.bf16.mxu0 0
      %265 = vmatpush1.bf16.msra.mxu0 %v237
      %266 = vmatprep.subr.bf16.mxu0 0
      %267 = vmatpush1.bf16.msra.mxu0 0
      %268 = vmatprep.subr.bf16.mxu0 0
      %269 = vmatpush1.bf16.msra.mxu0 0
      %270 = vmatprep.subr.bf16.mxu0 0
      %271 = vmatpush1.bf16.msra.mxu0 0
      %272 = vmatprep.subr.bf16.mxu0 0
      %273 = vmatpush1.bf16.msra.mxu0 0
      %274 = vmatprep.subr.bf16.mxu0 0
      %275 = vmatpush1.bf16.msra.mxu0 0
      %276 = vmatprep.subr.bf16.mxu0 0
      %277 = vmatpush1.bf16.msra.mxu0 0
      %278 = vmatprep.subr.bf16.mxu0 0
      %279 = vmatpush1.bf16.msra.mxu0 0
      %280 = vmatprep.subr.bf16.mxu0 0
      %281 = vmatpush1.bf16.msra.mxu0 0
      %282 = vmatprep.subr.bf16.mxu0 0
      %283 = vmatpush1.bf16.msra.mxu0 0
      %284 = vmatprep.subr.bf16.mxu0 0
      %285 = vmatpush1.bf16.msra.mxu0 0
      %286 = vmatprep.subr.bf16.mxu0 0
      %287 = vmatpush1.bf16.msra.mxu0 0
      %288 = vmatprep.subr.bf16.mxu0 0
      %289 = vmatpush1.bf16.msra.mxu0 0
      %290 = vmatprep.subr.bf16.mxu0 0
      %291 = vmatpush1.bf16.msra.mxu0 0
      %292 = vmatprep.subr.bf16.mxu0 0
      %293 = vmatpush1.bf16.msra.mxu0 0
      %294 = vmatprep.subr.bf16.mxu0 0
      %295 = vmatpush1.bf16.msra.mxu0 0
      %296 = vmatprep.mubr.bf16.mxu0 0
      %297 = vmatmul.mubr.bf16.gmra.mrb[0].mxu0 %v241
      %v298 = vpop.f32.mrb[0].mxu0
      %v299 = vadd.f32 0.0, %v298
      %v300 = vpop.f32.mrb[0].mxu0
      %v301 = vpop.f32.mrb[0].mxu0
      %v302 = vadd.f32 0.0, %v301
      %v303 = vpop.f32.mrb[0].mxu0
      %304 = vmatprep.mubr.bf16.mxu0 0
      %305 = vmatmul.mubr.bf16.gmra.mrb[0].mxu0 %v244
      %v306 = vpop.f32.mrb[0].mxu0
      %v307 = vadd.f32 0.0, %v306
      %v308 = vpop.f32.mrb[0].mxu0
      %v309 = vpop.f32.mrb[0].mxu0
      %v310 = vadd.f32 0.0, %v309
      %v311 = vpop.f32.mrb[0].mxu0
      %312 = vmatprep.mubr.bf16.mxu0 0
      %313 = vmatmul.mubr.bf16.gmra.mrb[0].mxu0 %v247
      %v314 = vpop.f32.mrb[0].mxu0
      %v315 = vadd.f32 0.0, %v314
      %v316 = vpop.f32.mrb[0].mxu0
      %v317 = vpop.f32.mrb[0].mxu0
      %v318 = vadd.f32 0.0, %v317
      %v319 = vpop.f32.mrb[0].mxu0
      %320 = vmatprep.mubr.bf16.mxu0 0
      %321 = vmatmul.mubr.bf16.gmra.mrb[0].mxu0 %v250
      %v322 = vpop.f32.mrb[0].mxu0
      %v323 = vadd.f32 0.0, %v322
      %v324 = vpop.f32.mrb[0].mxu0
      %v325 = vpop.f32.mrb[0].mxu0
      %v326 = vadd.f32 0.0, %v325
      %v327 = vpop.f32.mrb[0].mxu0
      %328 = vmatprep.mubr.bf16.mxu0 0
      %329 = vmatmul.mubr.bf16.gmra.mrb[0].mxu0 %v253
      %v330 = vpop.f32.mrb[0].mxu0
      %v331 = vadd.f32 0.0, %v330
      %v332 = vpop.f32.mrb[0].mxu0
      %v333 = vpop.f32.mrb[0].mxu0
      %v334 = vadd.f32 0.0, %v333
      %v335 = vpop.f32.mrb[0].mxu0
      %336 = vmatprep.mubr.bf16.mxu0 0
      %337 = vmatmul.mubr.bf16.gmra.mrb[0].mxu0 %v256
      %v338 = vpop.f32.mrb[0].mxu0
      %v339 = vadd.f32 0.0, %v338
      %v340 = vpop.f32.mrb[0].mxu0
      %v341 = vpop.f32.mrb[0].mxu0
      %v342 = vadd.f32 0.0, %v341
      %v343 = vpop.f32.mrb[0].mxu0
      %344 = vmatprep.mubr.bf16.mxu0 0
      %345 = vmatmul.mubr.bf16.gmra.mrb[0].mxu0 %v259
      %v346 = vpop.f32.mrb[0].mxu0
      %v347 = vadd.f32 0.0, %v346
      %v348 = vpop.f32.mrb[0].mxu0
      %v349 = vpop.f32.mrb[0].mxu0
      %v350 = vadd.f32 0.0, %v349
      %v351 = vpop.f32.mrb[0].mxu0
      %352 = vmatprep.mubr.bf16.mxu0 0
      %353 = vmatmul.mubr.bf16.gmra.mrb[0].mxu0 %v262
      %v354 = vpop.f32.mrb[0].mxu0
      %v355 = vadd.f32 0.0, %v354
      %v356 = vpop.f32.mrb[0].mxu0
      %v357 = vpop.f32.mrb[0].mxu0
      %v358 = vadd.f32 0.0, %v357
      %v359 = vpop.f32.mrb[0].mxu0
      %360 = vdwg.mxu0
      %v361 = vld [vmem:[%s2] sm:$0x1]
      %v362 = vlaneseq
      %v363 = vshrl.u32 %v362, 7
      %v364 = vsub.s32 0, %v363
      %v365 = vrot.slane %v361, %v364
      %v366 = vmul.f32 %v299, %v365
      %v367 = vmul.f32 %v302, %v365
      %v368 = vmul.f32 %v307, %v365
      %v369 = vmul.f32 %v310, %v365
      %v370 = vmul.f32 %v315, %v365
      %v371 = vmul.f32 %v318, %v365
      %v372 = vmul.f32 %v323, %v365
      %v373 = vmul.f32 %v326, %v365
      %v374 = vmul.f32 %v331, %v365
      %v375 = vmul.f32 %v334, %v365
      %v376 = vmul.f32 %v339, %v365
      %v377 = vmul.f32 %v342, %v365
      %v378 = vmul.f32 %v347, %v365
      %v379 = vmul.f32 %v350, %v365
      %v380 = vmul.f32 %v355, %v365
      %v381 = vmul.f32 %v358, %v365
      %v382 = vld [vmem:[%s2 + $0x1] sm:$0x1]
      %v383 = vlaneseq
      %v384 = vshrl.u32 %v383, 7
      %v385 = vsub.s32 0, %v384
      %v386 = vrot.slane %v382, %v385
      %v387 = vadd.f32 %v366, %v386
      %v388 = vadd.f32 %v367, %v386
      %v389 = vadd.f32 %v368, %v386
      %v390 = vadd.f32 %v369, %v386
      %v391 = vadd.f32 %v370, %v386
      %v392 = vadd.f32 %v371, %v386
      %v393 = vadd.f32 %v372, %v386
      %v394 = vadd.f32 %v373, %v386
      %v395 = vadd.f32 %v374, %v386
      %v396 = vadd.f32 %v375, %v386
      %v397 = vadd.f32 %v376, %v386
      %v398 = vadd.f32 %v377, %v386
      %v399 = vadd.f32 %v378, %v386
      %v400 = vadd.f32 %v379, %v386
      %v401 = vadd.f32 %v380, %v386
      %v402 = vadd.f32 %v381, %v386
      %vm403 = vcmp.ge.f32.partialorder %v387, 0.0
      %vm404 = vcmp.ge.f32.partialorder %v388, 0.0
      %vm405 = vcmp.ge.f32.partialorder %v389, 0.0
      %vm406 = vcmp.ge.f32.partialorder %v390, 0.0
      %vm407 = vcmp.ge.f32.partialorder %v391, 0.0
      %vm408 = vcmp.ge.f32.partialorder %v392, 0.0
      %vm409 = vcmp.ge.f32.partialorder %v393, 0.0
      %vm410 = vcmp.ge.f32.partialorder %v394, 0.0
      %vm411 = vcmp.ge.f32.partialorder %v395, 0.0
      %vm412 = vcmp.ge.f32.partialorder %v396, 0.0
      %vm413 = vcmp.ge.f32.partialorder %v397, 0.0
      %vm414 = vcmp.ge.f32.partialorder %v398, 0.0
      %vm415 = vcmp.ge.f32.partialorder %v399, 0.0
      %vm416 = vcmp.ge.f32.partialorder %v400, 0.0
      %vm417 = vcmp.ge.f32.partialorder %v401, 0.0
      %vm418 = vcmp.ge.f32.partialorder %v402, 0.0
      %v419 = vmul.f32 %v387, 0.2
      %v420 = vmul.f32 %v388, 0.2
      %v421 = vmul.f32 %v389, 0.2
      %v422 = vmul.f32 %v390, 0.2
      %v423 = vmul.f32 %v391, 0.2
      %v424 = vmul.f32 %v392, 0.2
      %v425 = vmul.f32 %v393, 0.2
      %v426 = vmul.f32 %v394, 0.2
      %v427 = vmul.f32 %v395, 0.2
      %v428 = vmul.f32 %v396, 0.2
      %v429 = vmul.f32 %v397, 0.2
      %v430 = vmul.f32 %v398, 0.2
      %v431 = vmul.f32 %v399, 0.2
      %v432 = vmul.f32 %v400, 0.2
      %v433 = vmul.f32 %v401, 0.2
      %v434 = vmul.f32 %v402, 0.2
      %v435 = vsel %vm403, %v387, %v419
      %v436 = vsel %vm404, %v388, %v420
      %v437 = vsel %vm405, %v389, %v421
      %v438 = vsel %vm406, %v390, %v422
      %v439 = vsel %vm407, %v391, %v423
      %v440 = vsel %vm408, %v392, %v424
      %v441 = vsel %vm409, %v393, %v425
      %v442 = vsel %vm410, %v394, %v426
      %v443 = vsel %vm411, %v395, %v427
      %v444 = vsel %vm412, %v396, %v428
      %v445 = vsel %vm413, %v397, %v429
      %v446 = vsel %vm414, %v398, %v430
      %v447 = vsel %vm415, %v399, %v431
      %v448 = vsel %vm416, %v400, %v432
      %v449 = vsel %vm417, %v401, %v433
      %v450 = vsel %vm418, %v402, %v434
      %v451 = vpack.c.bf16 %v436, %v435
      %v452 = vpack.c.bf16 %v438, %v437
      %v453 = vpack.c.bf16 %v440, %v439
      %v454 = vpack.c.bf16 %v442, %v441
      %v455 = vpack.c.bf16 %v444, %v443
      %v456 = vpack.c.bf16 %v446, %v445
      %v457 = vpack.c.bf16 %v448, %v447
      %v458 = vpack.c.bf16 %v450, %v449
      %v467 = vunpack.c.l.b16 %v451
      %v468 = vunpack.c.h.b16 %v451
      %v469 = vunpack.c.l.b16 %v452
      %v470 = vunpack.c.h.b16 %v452
      %v471 = vunpack.c.l.b16 %v453
      %v472 = vunpack.c.h.b16 %v453
      %v473 = vunpack.c.l.b16 %v454
      %v474 = vunpack.c.h.b16 %v454
      %v475 = vunpack.c.l.b16 %v455
      %v476 = vunpack.c.h.b16 %v455
      %v477 = vunpack.c.l.b16 %v456
      %v478 = vunpack.c.h.b16 %v456
      %v479 = vunpack.c.l.b16 %v457
      %v480 = vunpack.c.h.b16 %v457
      %v481 = vunpack.c.l.b16 %v458
      %v482 = vunpack.c.h.b16 %v458
      %v483 = vpack.c.b16 %v467, %v467
      %v484 = vpack.c.b16 %v468, %v468
      %v485 = vpack.c.b16 %v469, %v469
      %v486 = vpack.c.b16 %v470, %v470
      %v487 = vpack.c.b16 %v471, %v471
      %v488 = vpack.c.b16 %v472, %v472
      %v489 = vpack.c.b16 %v473, %v473
      %v490 = vpack.c.b16 %v474, %v474
      %v491 = vpack.c.b16 %v475, %v475
      %v492 = vpack.c.b16 %v476, %v476
      %v493 = vpack.c.b16 %v477, %v477
      %v494 = vpack.c.b16 %v478, %v478
      %v495 = vpack.c.b16 %v479, %v479
      %v496 = vpack.c.b16 %v480, %v480
      %v497 = vpack.c.b16 %v481, %v481
      %v498 = vpack.c.b16 %v482, %v482
      %vm515 = vcmask 60416
      %516 = vst.msk [vmem:[%s172] sm:$0xf] %vm515, %v483
      %517 = vst.msk [vmem:[%s172 + $0x4] sm:$0xf] %vm515, %v484
      %518 = vst.msk [vmem:[%s172 + $0x8] sm:$0xf] %vm515, %v485
      %519 = vst.msk [vmem:[%s172 + $0xc] sm:$0xf] %vm515, %v486
      %520 = vst.msk [vmem:[%s172 + $0x10] sm:$0xf] %vm515, %v487
      %521 = vst.msk [vmem:[%s172 + $0x14] sm:$0xf] %vm515, %v488
      %522 = vst.msk [vmem:[%s172 + $0x18] sm:$0xf] %vm515, %v489
      %523 = vst.msk [vmem:[%s172 + $0x1c] sm:$0xf] %vm515, %v490
      %524 = vst.msk [vmem:[%s172 + $0x20] sm:$0xf] %vm515, %v491
      %525 = vst.msk [vmem:[%s172 + $0x24] sm:$0xf] %vm515, %v492
      %526 = vst.msk [vmem:[%s172 + $0x28] sm:$0xf] %vm515, %v493
      %527 = vst.msk [vmem:[%s172 + $0x2c] sm:$0xf] %vm515, %v494
      %528 = vst.msk [vmem:[%s172 + $0x30] sm:$0xf] %vm515, %v495
      %529 = vst.msk [vmem:[%s172 + $0x34] sm:$0xf] %vm515, %v496
      %530 = vst.msk [vmem:[%s172 + $0x38] sm:$0xf] %vm515, %v497
      %531 = vst.msk [vmem:[%s172 + $0x3c] sm:$0xf] %vm515, %v498
      %s532 = smul.u32 16, %s14
      %p533 = scmp.lt.s32.totalorder %s532, 31
      %s534 = scalar_select %p533, %s532, 31
      %s535 = smul.addr %s534, 4
      %s536 = scalar_lea.vmem %s3, %s535
      // Predicated region
      $region33: #{tpu_custom_call.1} parent=31 // pred_check
        %p537 = pneg %p100
      $region34: #{tpu_custom_call.1} parent=31 // pred_check_branch
        %539 = sbr.rel (%p537) target = $region36
      $region35: #{tpu_custom_call.1} parent=31 // pred_region
        %s540 = smul.u32 16, %s14
      $region36: #{tpu_custom_call.1} parent=31 // pred_fallthru
        _
    $region32: #{tpu_custom_call.1} parent=5 // pred_fallthru
      _
    %p541 = scmp.le.s32.totalorder 2, %s9
    // Predicated region
    $region37: #{tpu_custom_call.1} parent=5 // pred_check
      %p542 = pneg %p541
    $region38: #{tpu_custom_call.1} parent=5 // pred_check_branch
      %544 = sbr.rel (%p542) target = $region40
    $region39: #{tpu_custom_call.1} parent=5 // pred_region
      %s545 = ssub.s32 %s9, 2
      // Predicated region
      $region41: #{tpu_custom_call.1} parent=39 // pred_check
        %p546 = pneg %p106
      $region42: #{tpu_custom_call.1} parent=39 // pred_check_branch
        %548 = sbr.rel (%p546) target = $region44
      $region43: #{tpu_custom_call.1} parent=39 // pred_region
        %s549 = smul.u32 16, %s15
        %p550 = scmp.lt.s32.totalorder %s549, 31
        %s551 = scalar_select %p550, %s549, 31
        %s552 = smul.addr %s551, 4
        %s553 = scalar_lea.vmem %s3, %s552
      $region44: #{tpu_custom_call.1} parent=39 // pred_fallthru
        _
    $region40: #{tpu_custom_call.1} parent=5 // pred_fallthru
      _
  $region6: #{tpu_custom_call.1} parent=0 // loop_footer
    %s13 = sadd.s32 1, %s9
  $region7: #{tpu_custom_call.1} parent=0 // loop_footer_branch
    %8 = sbr.rel target = $region3
  $region8: #{tpu_custom_call.1} parent=0 // loop_exit
    _

</llo_original>
